<compile_context>
chip_gen: v5e
topology: v5e:2x2
jax: 0.10.0
libtpu: 0.0.40
codegen_flags: <defaults>
</compile_context>

<pallas_src>
import functools

import jax
import jax.numpy as jnp
from jax import lax
from jax.experimental import pallas as pl
from jax.experimental.pallas import tpu as pltpu

C = 64            # fixed by the module: Conv2d(64, 64, kernel_size=3, padding=1)
KH = KW = 3
KK = KH * KW * C  # fused contraction dim = 576


def _residual_block_kernel(x_ref, w1_ref, b1_ref, w2_ref, b2_ref, out_ref,
                           *, H, W):
    """One batch element per grid step.

    x_ref  : (1, H, W, C)   f32  unpadded NHWC input block
    w1_ref : (9*C, C)       f32  conv1 weights, rows ordered (ky, kx, ci)
    b1_ref : (1, C)         f32
    w2_ref : (9*C, C)       f32  conv2 weights
    b2_ref : (1, C)         f32
    out_ref: (1, H, W*C)    f32  lane-dense output block
    """
    x = x_ref[0]  # (H, W, C)

    def conv3x3(v, w_ref, b_ref):
        # Zero halo built in-value: (H, W, C) -> (H+2, W+2, C).
        zc = jnp.zeros((H, 1, C), jnp.float32)
        vp = jnp.concatenate([zc, v, zc], axis=1)            # (H, W+2, C)
        zr = jnp.zeros((1, W + 2, C), jnp.float32)
        vp = jnp.concatenate([zr, vp, zr], axis=0)           # (H+2, W+2, C)

        # im2col with ALL 9 taps fused on the contraction dim:
        #   cols[h, w, kx*C+ci]          = vp[h,      w+kx, ci]
        #   slab[h, w, ky*3C+kx*C+ci]    = vp[h+ky,   w+kx, ci]
        cols = jnp.concatenate([vp[:, kx:kx + W, :] for kx in range(KW)],
                               axis=-1)                      # (H+2, W, 3C)
        slab = jnp.concatenate([cols[ky:ky + H] for ky in range(KH)],
                               axis=-1)                      # (H, W, 9C)

        # One MXU matmul per conv: (H*W, 576) @ (576, 64) -> (H*W, 64).
        y = jnp.dot(slab.reshape(H * W, KK), w_ref[...],
                    preferred_element_type=jnp.float32)
        return y + b_ref[...]

    # ---- conv1 + bias + LeakyReLU(0.2) --------------------------------------
    a = conv3x3(x, w1_ref, b1_ref)                           # (H*W, C)
    a = jnp.where(a >= 0, a, 0.2 * a)

    # ---- conv2 + bias --------------------------------------------------------
    y = conv3x3(a.reshape(H, W, C), w2_ref, b2_ref)          # (H*W, C)

    # ---- residual add + lane-dense store ------------------------------------
    y = y.reshape(H, W, C) + x
    out_ref[0] = y.reshape(H, W * C).astype(out_ref.dtype)


def residual_block_sr(x_nchw, w1_oihw, b1, w2_oihw, b2):
    """x_nchw: (N, 64, H, W) f32; conv weights in PyTorch OIHW layout."""
    N, Cin, H, W = x_nchw.shape
    assert Cin == C

    # NCHW -> NHWC (single XLA transpose; spatial padding is done in-kernel).
    x_nhwc = jnp.transpose(x_nchw, (0, 2, 3, 1))             # (N, H, W, C)

    def pack_w(w_oihw):
        # OIHW -> (ky, kx, ci, co) -> (9*C, C); row index = ky*3C + kx*C + ci,
        # matching the kernel's fused im2col slab ordering.
        return jnp.transpose(w_oihw, (2, 3, 1, 0)).reshape(KK, C)

    w1 = pack_w(w1_oihw)
    w2 = pack_w(w2_oihw)
    b1_2d = b1.reshape(1, C)
    b2_2d = b2.reshape(1, C)

    kernel = functools.partial(_residual_block_kernel, H=H, W=W)

    # Per-step VMEM footprint estimate: double-buffered in/out blocks, weights,
    # plus in-kernel temporaries (padded activation, cols, 9C slab ~ 14x act).
    elem = 4  # f32
    act_bytes = H * W * C * elem
    w_bytes = 2 * KK * C * elem
    est = 4 * act_bytes + 2 * w_bytes + 24 * act_bytes
    vmem_limit = int(min(max(2 * est, 32 << 20), 64 << 20))  # valid on v7x too

    out_flat = pl.pallas_call(
        kernel,
        out_shape=jax.ShapeDtypeStruct((N, H, W * C), x_nhwc.dtype),
        grid_spec=pltpu.PrefetchScalarGridSpec(
            num_scalar_prefetch=0,
            grid=(N,),
            in_specs=[
                pl.BlockSpec((1, H, W, C), lambda n: (n, 0, 0, 0)),
                pl.BlockSpec((KK, C), lambda n: (0, 0)),
                pl.BlockSpec((1, C), lambda n: (0, 0)),
                pl.BlockSpec((KK, C), lambda n: (0, 0)),
                pl.BlockSpec((1, C), lambda n: (0, 0)),
            ],
            out_specs=pl.BlockSpec((1, H, W * C), lambda n: (n, 0, 0)),
        ),
        compiler_params=pltpu.CompilerParams(
            dimension_semantics=("parallel",),
            vmem_limit_bytes=vmem_limit),
    )(x_nhwc, w1, b1_2d, w2, b2_2d)

    out_nhwc = out_flat.reshape(N, H, W, C)
    return jnp.transpose(out_nhwc, (0, 3, 1, 2))             # back to NCHW


def _reference_forward(x, w1, b1, w2, b2):
    """Plain-JAX reference matching the PyTorch forward (NCHW/OIHW)."""
    dn = ("NCHW", "OIHW", "NCHW")
    y = lax.conv_general_dilated(x, w1, (1, 1), ((1, 1), (1, 1)),
                                 dimension_numbers=dn)
    y = y + b1[None, :, None, None]
    y = jnp.where(y >= 0, y, 0.2 * y)
    y = lax.conv_general_dilated(y, w2, (1, 1), ((1, 1), (1, 1)),
                                 dimension_numbers=dn)
    y = y + b2[None, :, None, None]
    return y + x


if __name__ == "__main__":
    key = jax.random.PRNGKey(0)
    k_x, k_w1, k_b1, k_w2, k_b2 = jax.random.split(key, 5)

    N, H, W = 2, 8, 8  # channels fixed at 64 by the module
    x = jax.random.normal(k_x, (N, C, H, W), dtype=jnp.float32)

    # Deterministic init matching PyTorch Conv2d default bounds:
    # kaiming_uniform(a=sqrt(5)) / bias uniform -> bound = 1/sqrt(fan_in) = 1/24.
    fan_in = C * 3 * 3
    bound = 1.0 / jnp.sqrt(jnp.float32(fan_in))
    w1 = jax.random.uniform(k_w1, (C, C, 3, 3), jnp.float32, -bound, bound)
    b1 = jax.random.uniform(k_b1, (C,), jnp.float32, -bound, bound)
    w2 = jax.random.uniform(k_w2, (C, C, 3, 3), jnp.float32, -bound, bound)
    b2 = jax.random.uniform(k_b2, (C,), jnp.float32, -bound, bound)

    out = residual_block_sr(x, w1, b1, w2, b2)
    out = jax.block_until_ready(out)

    ref = _reference_forward(x, w1, b1, w2, b2)
    assert out.shape == (N, C, H, W)
    assert jnp.allclose(out, ref, rtol=2e-3, atol=2e-3), (
        float(jnp.max(jnp.abs(out - ref))))

    print("KERNEL_OK")
</pallas_src>

<mosaic_0001>
module attributes {stable_mosaic.version = 11 : i64} {
  func.func @_residual_block_kernel(%arg0: i32, %arg1: memref<1x8x8x64xf32, #tpu.memory_space<vmem>>, %arg2: memref<576x64xf32, #tpu.memory_space<vmem>>, %arg3: memref<1x64xf32, #tpu.memory_space<vmem>>, %arg4: memref<576x64xf32, #tpu.memory_space<vmem>>, %arg5: memref<1x64xf32, #tpu.memory_space<vmem>>, %arg6: memref<1x8x512xf32, #tpu.memory_space<vmem>>) attributes {dimension_semantics = [#tpu.dimension_semantics<parallel>], iteration_bounds = array<i64: 2>, scalar_prefetch = 0 : i64, scratch_operands = 0 : i64, tpu.core_type = #tpu.core_type<tc>, window_params = [{transform_indices = @transform_0, window_bounds = array<i64: 1, 8, 8, 64>}, {pipeline_mode = #tpu.pipeline_mode<synchronous>, transform_indices = @transform_1, window_bounds = array<i64: 576, 64>}, {pipeline_mode = #tpu.pipeline_mode<synchronous>, transform_indices = @transform_2, window_bounds = array<i64: 1, 64>}, {pipeline_mode = #tpu.pipeline_mode<synchronous>, transform_indices = @transform_3, window_bounds = array<i64: 576, 64>}, {pipeline_mode = #tpu.pipeline_mode<synchronous>, transform_indices = @transform_4, window_bounds = array<i64: 1, 64>}, {transform_indices = @transform_5, window_bounds = array<i64: 1, 8, 512>}]} {
    %c0 = arith.constant 0 : index
    %c0_0 = arith.constant 0 : index
    %c0_1 = arith.constant 0 : index
    %c0_2 = arith.constant 0 : index
    %0 = vector.load %arg1[%c0, %c0_0, %c0_1, %c0_2] : memref<1x8x8x64xf32, #tpu.memory_space<vmem>>, vector<1x8x8x64xf32>
    %1 = vector.shape_cast %0 : vector<1x8x8x64xf32> to vector<8x8x64xf32>
    %cst = arith.constant 0.000000e+00 : f32
    %2 = vector.broadcast %cst : f32 to vector<8x1x64xf32>
    %3 = tpu.concatenate %2, %1, %2 in 1 : vector<8x1x64xf32>, vector<8x8x64xf32>, vector<8x1x64xf32> -> vector<8x10x64xf32>
    %cst_3 = arith.constant 0.000000e+00 : f32
    %4 = vector.broadcast %cst_3 : f32 to vector<1x10x64xf32>
    %5 = tpu.concatenate %4, %3, %4 in 0 : vector<1x10x64xf32>, vector<8x10x64xf32>, vector<1x10x64xf32> -> vector<10x10x64xf32>
    %6 = vector.extract_strided_slice %5 {offsets = [0, 0, 0], sizes = [10, 8, 64], strides = [1, 1, 1]} : vector<10x10x64xf32> to vector<10x8x64xf32>
    %7 = vector.extract_strided_slice %5 {offsets = [0, 1, 0], sizes = [10, 8, 64], strides = [1, 1, 1]} : vector<10x10x64xf32> to vector<10x8x64xf32>
    %8 = vector.extract_strided_slice %5 {offsets = [0, 2, 0], sizes = [10, 8, 64], strides = [1, 1, 1]} : vector<10x10x64xf32> to vector<10x8x64xf32>
    %9 = tpu.concatenate %6, %7, %8 in 2 : vector<10x8x64xf32>, vector<10x8x64xf32>, vector<10x8x64xf32> -> vector<10x8x192xf32>
    %10 = vector.extract_strided_slice %9 {offsets = [0, 0, 0], sizes = [8, 8, 192], strides = [1, 1, 1]} : vector<10x8x192xf32> to vector<8x8x192xf32>
    %11 = vector.extract_strided_slice %9 {offsets = [1, 0, 0], sizes = [8, 8, 192], strides = [1, 1, 1]} : vector<10x8x192xf32> to vector<8x8x192xf32>
    %12 = vector.extract_strided_slice %9 {offsets = [2, 0, 0], sizes = [8, 8, 192], strides = [1, 1, 1]} : vector<10x8x192xf32> to vector<8x8x192xf32>
    %13 = tpu.concatenate %10, %11, %12 in 2 : vector<8x8x192xf32>, vector<8x8x192xf32>, vector<8x8x192xf32> -> vector<8x8x576xf32>
    %14 = vector.shape_cast %13 : vector<8x8x576xf32> to vector<64x576xf32>
    %c0_4 = arith.constant 0 : index
    %c0_5 = arith.constant 0 : index
    %15 = vector.load %arg2[%c0_4, %c0_5] : memref<576x64xf32, #tpu.memory_space<vmem>>, vector<576x64xf32>
    %cst_6 = arith.constant dense<0.000000e+00> : vector<64x64xf32>
    %16 = tpu.matmul %14, %15, %cst_6 {dimension_numbers = #tpu.dot_dimension_numbers<[1], [0], [0], [1], [0, 0, 1, 1], [], []>} : vector<64x576xf32>, vector<576x64xf32>, vector<64x64xf32> -> vector<64x64xf32>
    %c0_7 = arith.constant 0 : index
    %c0_8 = arith.constant 0 : index
    %17 = vector.load %arg3[%c0_7, %c0_8] : memref<1x64xf32, #tpu.memory_space<vmem>>, vector<1x64xf32>
    %18 = vector.broadcast %17 : vector<1x64xf32> to vector<64x64xf32>
    %19 = arith.addf %16, %18 : vector<64x64xf32>
    %cst_9 = arith.constant 0.000000e+00 : f32
    %20 = vector.broadcast %cst_9 : f32 to vector<64x64xf32>
    %21 = arith.cmpf oge, %19, %20 : vector<64x64xf32>
    %cst_10 = arith.constant 2.000000e-01 : f32
    %22 = vector.broadcast %cst_10 : f32 to vector<64x64xf32>
    %23 = arith.mulf %22, %19 : vector<64x64xf32>
    %24 = arith.select %21, %19, %23 : vector<64x64xi1>, vector<64x64xf32>
    %25 = vector.shape_cast %24 : vector<64x64xf32> to vector<8x8x64xf32>
    %cst_11 = arith.constant 0.000000e+00 : f32
    %26 = vector.broadcast %cst_11 : f32 to vector<8x1x64xf32>
    %27 = tpu.concatenate %26, %25, %26 in 1 : vector<8x1x64xf32>, vector<8x8x64xf32>, vector<8x1x64xf32> -> vector<8x10x64xf32>
    %cst_12 = arith.constant 0.000000e+00 : f32
    %28 = vector.broadcast %cst_12 : f32 to vector<1x10x64xf32>
    %29 = tpu.concatenate %28, %27, %28 in 0 : vector<1x10x64xf32>, vector<8x10x64xf32>, vector<1x10x64xf32> -> vector<10x10x64xf32>
    %30 = vector.extract_strided_slice %29 {offsets = [0, 0, 0], sizes = [10, 8, 64], strides = [1, 1, 1]} : vector<10x10x64xf32> to vector<10x8x64xf32>
    %31 = vector.extract_strided_slice %29 {offsets = [0, 1, 0], sizes = [10, 8, 64], strides = [1, 1, 1]} : vector<10x10x64xf32> to vector<10x8x64xf32>
    %32 = vector.extract_strided_slice %29 {offsets = [0, 2, 0], sizes = [10, 8, 64], strides = [1, 1, 1]} : vector<10x10x64xf32> to vector<10x8x64xf32>
    %33 = tpu.concatenate %30, %31, %32 in 2 : vector<10x8x64xf32>, vector<10x8x64xf32>, vector<10x8x64xf32> -> vector<10x8x192xf32>
    %34 = vector.extract_strided_slice %33 {offsets = [0, 0, 0], sizes = [8, 8, 192], strides = [1, 1, 1]} : vector<10x8x192xf32> to vector<8x8x192xf32>
    %35 = vector.extract_strided_slice %33 {offsets = [1, 0, 0], sizes = [8, 8, 192], strides = [1, 1, 1]} : vector<10x8x192xf32> to vector<8x8x192xf32>
    %36 = vector.extract_strided_slice %33 {offsets = [2, 0, 0], sizes = [8, 8, 192], strides = [1, 1, 1]} : vector<10x8x192xf32> to vector<8x8x192xf32>
    %37 = tpu.concatenate %34, %35, %36 in 2 : vector<8x8x192xf32>, vector<8x8x192xf32>, vector<8x8x192xf32> -> vector<8x8x576xf32>
    %38 = vector.shape_cast %37 : vector<8x8x576xf32> to vector<64x576xf32>
    %c0_13 = arith.constant 0 : index
    %c0_14 = arith.constant 0 : index
    %39 = vector.load %arg4[%c0_13, %c0_14] : memref<576x64xf32, #tpu.memory_space<vmem>>, vector<576x64xf32>
    %cst_15 = arith.constant dense<0.000000e+00> : vector<64x64xf32>
    %40 = tpu.matmul %38, %39, %cst_15 {dimension_numbers = #tpu.dot_dimension_numbers<[1], [0], [0], [1], [0, 0, 1, 1], [], []>} : vector<64x576xf32>, vector<576x64xf32>, vector<64x64xf32> -> vector<64x64xf32>
    %c0_16 = arith.constant 0 : index
    %c0_17 = arith.constant 0 : index
    %41 = vector.load %arg5[%c0_16, %c0_17] : memref<1x64xf32, #tpu.memory_space<vmem>>, vector<1x64xf32>
    %42 = vector.broadcast %41 : vector<1x64xf32> to vector<64x64xf32>
    %43 = arith.addf %40, %42 : vector<64x64xf32>
    %44 = vector.shape_cast %43 : vector<64x64xf32> to vector<8x8x64xf32>
    %45 = arith.addf %44, %1 : vector<8x8x64xf32>
    %46 = vector.shape_cast %45 : vector<8x8x64xf32> to vector<8x512xf32>
    %c0_18 = arith.constant 0 : index
    %c0_19 = arith.constant 0 : index
    %c0_20 = arith.constant 0 : index
    %47 = vector.load %arg6[%c0_18, %c0_19, %c0_20] : memref<1x8x512xf32, #tpu.memory_space<vmem>>, vector<1x8x512xf32>
    %48 = vector.shape_cast %47 : vector<1x8x512xf32> to vector<8x512xf32>
    %49 = vector.shape_cast %46 : vector<8x512xf32> to vector<1x8x512xf32>
    tpu.vector_store %arg6[%c0_18, %c0_19, %c0_20], %49 {strides = array<i32>} : memref<1x8x512xf32, #tpu.memory_space<vmem>>, vector<1x8x512xf32>,
    return
  }
  func.func @transform_0(%arg0: i32) -> (i32, i32, i32, i32) {
    %c0_i32 = arith.constant 0 : i32
    %c0_i32_0 = arith.constant 0 : i32
    %c0_i32_1 = arith.constant 0 : i32
    %c0_i32_2 = arith.constant 0 : i32
    return %arg0, %c0_i32, %c0_i32_0, %c0_i32_1 : i32, i32, i32, i32
  }
  func.func @transform_1(%arg0: i32) -> (i32, i32) {
    %c0_i32 = arith.constant 0 : i32
    %c0_i32_0 = arith.constant 0 : i32
    %c0_i32_1 = arith.constant 0 : i32
    return %c0_i32, %c0_i32_0 : i32, i32
  }
  func.func @transform_2(%arg0: i32) -> (i32, i32) {
    %c0_i32 = arith.constant 0 : i32
    %c0_i32_0 = arith.constant 0 : i32
    %c0_i32_1 = arith.constant 0 : i32
    return %c0_i32, %c0_i32_0 : i32, i32
  }
  func.func @transform_3(%arg0: i32) -> (i32, i32) {
    %c0_i32 = arith.constant 0 : i32
    %c0_i32_0 = arith.constant 0 : i32
    %c0_i32_1 = arith.constant 0 : i32
    return %c0_i32, %c0_i32_0 : i32, i32
  }
  func.func @transform_4(%arg0: i32) -> (i32, i32) {
    %c0_i32 = arith.constant 0 : i32
    %c0_i32_0 = arith.constant 0 : i32
    %c0_i32_1 = arith.constant 0 : i32
    return %c0_i32, %c0_i32_0 : i32, i32
  }
  func.func @transform_5(%arg0: i32) -> (i32, i32, i32) {
    %c0_i32 = arith.constant 0 : i32
    %c0_i32_0 = arith.constant 0 : i32
    %c0_i32_1 = arith.constant 0 : i32
    return %arg0, %c0_i32, %c0_i32_0 : i32, i32, i32
  }
}

</mosaic_0001>

<llo_original>
// kernel: tpu_custom_call.1
$region0: #{tpu_custom_call.1}
  #allocation0 [shape = 'u32[]', space=smem, size = 0x4, offset = 0x4, fixed_abs, tag = 'smem constant byte address 0x4 - core index']
  #allocation1 [shape = 'u32[72,128]{1,0:T(1,128)}', space=vmem, size = 0x9000, scoped, tag = 'internal scratch']
  %s0 = inlined_call_operand.vmem [shape: f32[2,8,8,64], index: 0, kind: input, shape index: {}]
  %s1 = inlined_call_operand.vmem [shape: f32[576,64], index: 1, kind: input, shape index: {}]
  %s2 = inlined_call_operand.vmem [shape: f32[1,64], index: 2, kind: input, shape index: {}]
  %s3 = inlined_call_operand.vmem [shape: f32[576,64], index: 3, kind: input, shape index: {}]
  %s4 = inlined_call_operand.vmem [shape: f32[1,64], index: 4, kind: input, shape index: {}]
  %s5 = inlined_call_operand.hbm [shape: f32[2,8,512], index: 5, kind: output, shape index: {}]
  %s6 = sld [smem:[#allocation0]]
  $region53: #{tpu_custom_call.1} parent=0
    _
  %s8 = ssub.s32 1, %s6
  %s9 = scalar_select 0, %s8, %s6
  $region1: #{tpu_custom_call.1} parent=0
    #allocation2 [shape = 'u8[32768]{0}', space=vmem, size = 0x8000, scoped, tag = 'output window, operand 0']
    #allocation3 [shape = 's32[2]{0}', space=sflag, size = 0x8, scoped, tag = 'scoped memory for tpu_custom_call.1']
    %10 = vsyncpa [#allocation3], 0
    %s11 = scalar_lea.sflag [#allocation3], 1
    %12 = vsyncpa %s11, 0
    loop: start=0, step=1, limit=4
    $region2: #{tpu_custom_call.1} parent=1 // loop_pre_header
      _
    $region3: #{tpu_custom_call.1} parent=1 // loop_header
      %s14 = sphi 0, %s18
      %p15 = scmp.ge.s32.totalorder %s14, 4
      %s24 = sphi 0, %s26
      %s27 = sphi 0, %s24
      %s28 = sphi 0, %s27
      %s44 = sphi 0, %s28
      %s48 = sphi 0, %s48
      %s50 = sphi 0, %s48
      %s51 = sphi 0, %s50
      %s65 = sphi 0, %s51
      %s69 = sphi 0, %s69
      %s71 = sphi 0, %s69
      %s72 = sphi 0, %s71
      %s86 = sphi 0, %s72
      %s90 = sphi 0, %s90
      %s92 = sphi 0, %s90
      %s93 = sphi 0, %s92
      %s107 = sphi 0, %s93
      %s111 = sphi 0, %s111
      %s113 = sphi 0, %s111
      %s114 = sphi 0, %s113
      %s128 = sphi 0, %s114
      %s134 = sphi 0, %s136
      %s137 = sphi 0, %s134
      %s138 = sphi 0, %s137
      %s154 = sphi 0, %s138
    $region4: #{tpu_custom_call.1} parent=1 // loop_header_branch
      %17 = sbr.rel (%p15) target = $region8
    $region5: #{tpu_custom_call.1} parent=1 // loop_body
      %s19 = ssub.s32 %s14, 1
      %s20 = ssub.s32 %s14, 2
      %s21 = sadd.s32 %s14, 1
      %s22 = ssub.s32 %s14, %s21
      %p23 = scmp.eq.s32.totalorder %s22, 0
      %s25 = sadd.s32 %s24, 1
      %s26 = scalar_select %p23, %s24, %s25
      %p29 = pneg %p23
      %p30 = scmp.eq.s32.totalorder %s14, 1
      %p31 = por %p29, %p30
      %p32 = scmp.ne.s32.totalorder %s24, %s27
      %p33 = scmp.eq.s32.totalorder %s14, 0
      %p34 = por %p32, %p33
      %p35 = scmp.ne.s32.totalorder %s24, %s27
      %p36 = scmp.eq.s32.totalorder %s19, 1
      %p37 = por %p35, %p36
      %p38 = scmp.ne.s32.totalorder %s27, %s28
      %p39 = scmp.eq.s32.totalorder %s19, 0
      %p40 = por %p38, %p39
      %p41 = scmp.ne.s32.totalorder %s27, %s28
      %p42 = scmp.eq.s32.totalorder %s20, 1
      %p43 = por %p41, %p42
      %p45 = scmp.ne.s32.totalorder %s28, %s44
      %p46 = scmp.eq.s32.totalorder %s20, 0
      %p47 = por %p45, %p46
      %s49 = sadd.s32 %s48, 1
      %p52 = scmp.eq.s32.totalorder %s14, 1
      %p53 = scmp.ne.s32.totalorder %s48, %s50
      %p54 = scmp.eq.s32.totalorder %s14, 0
      %p55 = por %p53, %p54
      %p56 = scmp.ne.s32.totalorder %s48, %s50
      %p57 = scmp.eq.s32.totalorder %s19, 1
      %p58 = por %p56, %p57
      %p59 = scmp.ne.s32.totalorder %s50, %s51
      %p60 = scmp.eq.s32.totalorder %s19, 0
      %p61 = por %p59, %p60
      %p62 = scmp.ne.s32.totalorder %s50, %s51
      %p63 = scmp.eq.s32.totalorder %s20, 1
      %p64 = por %p62, %p63
      %p66 = scmp.ne.s32.totalorder %s51, %s65
      %p67 = scmp.eq.s32.totalorder %s20, 0
      %p68 = por %p66, %p67
      %s70 = sadd.s32 %s69, 1
      %p73 = scmp.eq.s32.totalorder %s14, 1
      %p74 = scmp.ne.s32.totalorder %s69, %s71
      %p75 = scmp.eq.s32.totalorder %s14, 0
      %p76 = por %p74, %p75
      %p77 = scmp.ne.s32.totalorder %s69, %s71
      %p78 = scmp.eq.s32.totalorder %s19, 1
      %p79 = por %p77, %p78
      %p80 = scmp.ne.s32.totalorder %s71, %s72
      %p81 = scmp.eq.s32.totalorder %s19, 0
      %p82 = por %p80, %p81
      %p83 = scmp.ne.s32.totalorder %s71, %s72
      %p84 = scmp.eq.s32.totalorder %s20, 1
      %p85 = por %p83, %p84
      %p87 = scmp.ne.s32.totalorder %s72, %s86
      %p88 = scmp.eq.s32.totalorder %s20, 0
      %p89 = por %p87, %p88
      %s91 = sadd.s32 %s90, 1
      %p94 = scmp.eq.s32.totalorder %s14, 1
      %p95 = scmp.ne.s32.totalorder %s90, %s92
      %p96 = scmp.eq.s32.totalorder %s14, 0
      %p97 = por %p95, %p96
      %p98 = scmp.ne.s32.totalorder %s90, %s92
      %p99 = scmp.eq.s32.totalorder %s19, 1
      %p100 = por %p98, %p99
      %p101 = scmp.ne.s32.totalorder %s92, %s93
      %p102 = scmp.eq.s32.totalorder %s19, 0
      %p103 = por %p101, %p102
      %p104 = scmp.ne.s32.totalorder %s92, %s93
      %p105 = scmp.eq.s32.totalorder %s20, 1
      %p106 = por %p104, %p105
      %p108 = scmp.ne.s32.totalorder %s93, %s107
      %p109 = scmp.eq.s32.totalorder %s20, 0
      %p110 = por %p108, %p109
      %s112 = sadd.s32 %s111, 1
      %p115 = scmp.eq.s32.totalorder %s14, 1
      %p116 = scmp.ne.s32.totalorder %s111, %s113
      %p117 = scmp.eq.s32.totalorder %s14, 0
      %p118 = por %p116, %p117
      %p119 = scmp.ne.s32.totalorder %s111, %s113
      %p120 = scmp.eq.s32.totalorder %s19, 1
      %p121 = por %p119, %p120
      %p122 = scmp.ne.s32.totalorder %s113, %s114
      %p123 = scmp.eq.s32.totalorder %s19, 0
      %p124 = por %p122, %p123
      %p125 = scmp.ne.s32.totalorder %s113, %s114
      %p126 = scmp.eq.s32.totalorder %s20, 1
      %p127 = por %p125, %p126
      %p129 = scmp.ne.s32.totalorder %s114, %s128
      %p130 = scmp.eq.s32.totalorder %s20, 0
      %p131 = por %p129, %p130
      %s132 = ssub.s32 %s14, %s21
      %p133 = scmp.eq.s32.totalorder %s132, 0
      %s135 = sadd.s32 %s134, 1
      %s136 = scalar_select %p133, %s134, %s135
      %p139 = pneg %p133
      %p140 = scmp.eq.s32.totalorder %s14, 1
      %p141 = por %p139, %p140
      %p142 = scmp.ne.s32.totalorder %s134, %s137
      %p143 = scmp.eq.s32.totalorder %s14, 0
      %p144 = por %p142, %p143
      %p145 = scmp.ne.s32.totalorder %s134, %s137
      %p146 = scmp.eq.s32.totalorder %s19, 1
      %p147 = por %p145, %p146
      %p148 = scmp.ne.s32.totalorder %s137, %s138
      %p149 = scmp.eq.s32.totalorder %s19, 0
      %p150 = por %p148, %p149
      %p151 = scmp.ne.s32.totalorder %s137, %s138
      %p152 = scmp.eq.s32.totalorder %s20, 1
      %p153 = por %p151, %p152
      %p155 = scmp.ne.s32.totalorder %s138, %s154
      %p156 = scmp.eq.s32.totalorder %s20, 0
      %p157 = por %p155, %p156
      %p158 = scmp.le.s32.totalorder 1, %s14
      %p159 = scmp.lt.s32.totalorder %s14, 3
      %p160 = pnand %p158, %p159
      %p161 = pneg %p160
      // Predicated region
      $region9: #{tpu_custom_call.1} parent=5 // pred_check
        _
      $region10: #{tpu_custom_call.1} parent=5 // pred_check_branch
        %163 = sbr.rel (%p160) target = $region12
      $region11: #{tpu_custom_call.1} parent=5 // pred_region
        %s164 = ssub.s32 %s14, 1
        // Predicated region
        $region13: #{tpu_custom_call.1} parent=11 // pred_check
          %p165 = pneg %p61
        $region14: #{tpu_custom_call.1} parent=11 // pred_check_branch
          %167 = sbr.rel (%p165) target = $region16
        $region15: #{tpu_custom_call.1} parent=11 // pred_region
          _
        $region16: #{tpu_custom_call.1} parent=11 // pred_fallthru
          _
        // Predicated region
        $region17: #{tpu_custom_call.1} parent=11 // pred_check
          %p168 = pneg %p82
        $region18: #{tpu_custom_call.1} parent=11 // pred_check_branch
          %170 = sbr.rel (%p168) target = $region20
        $region19: #{tpu_custom_call.1} parent=11 // pred_region
          _
        $region20: #{tpu_custom_call.1} parent=11 // pred_fallthru
          _
        // Predicated region
        $region21: #{tpu_custom_call.1} parent=11 // pred_check
          %p171 = pneg %p103
        $region22: #{tpu_custom_call.1} parent=11 // pred_check_branch
          %173 = sbr.rel (%p171) target = $region24
        $region23: #{tpu_custom_call.1} parent=11 // pred_region
          _
        $region24: #{tpu_custom_call.1} parent=11 // pred_fallthru
          _
        // Predicated region
        $region25: #{tpu_custom_call.1} parent=11 // pred_check
          %p174 = pneg %p124
        $region26: #{tpu_custom_call.1} parent=11 // pred_check_branch
          %176 = sbr.rel (%p174) target = $region28
        $region27: #{tpu_custom_call.1} parent=11 // pred_region
          _
        $region28: #{tpu_custom_call.1} parent=11 // pred_fallthru
          _
      $region12: #{tpu_custom_call.1} parent=5 // pred_fallthru
        _
      %p177 = scmp.lt.s32.totalorder %s14, 2
      // Predicated region
      $region29: #{tpu_custom_call.1} parent=5 // pred_check
        %p178 = pneg %p177
      $region30: #{tpu_custom_call.1} parent=5 // pred_check_branch
        %180 = sbr.rel (%p178) target = $region32
      $region31: #{tpu_custom_call.1} parent=5 // pred_region
        // Predicated region
        $region33: #{tpu_custom_call.1} parent=31 // pred_check
          %p181 = pneg %p34
        $region34: #{tpu_custom_call.1} parent=31 // pred_check_branch
          %183 = sbr.rel (%p181) target = $region36
        $region35: #{tpu_custom_call.1} parent=31 // pred_region
          %p184 = scmp.lt.s32.totalorder %s14, 1
          %s185 = scalar_select %p184, %s14, 1
          %s186 = smul.addr %s185, 8
          %s187 = smul.addr %s186, 8
          %s188 = scalar_lea.vmem %s0, %s187
        $region36: #{tpu_custom_call.1} parent=31 // pred_fallthru
          _
      $region32: #{tpu_custom_call.1} parent=5 // pred_fallthru
        _
      %p189 = scmp.le.s32.totalorder 1, %s14
      %p190 = scmp.lt.s32.totalorder %s14, 3
      %p191 = pnand %p189, %p190
      %p192 = pneg %p191
      // Predicated region
      $region37: #{tpu_custom_call.1} parent=5 // pred_check
        _
      $region38: #{tpu_custom_call.1} parent=5 // pred_check_branch
        %194 = sbr.rel (%p191) target = $region40
      $region39: #{tpu_custom_call.1} parent=5 // pred_region
        %s195 = ssub.s32 %s14, 1
        %p196 = scmp.lt.s32.totalorder %s19, 1
        %s197 = scalar_select %p196, %s19, 1
        %s198 = smul.addr %s197, 8
        %s199 = smul.addr %s198, 8
        %s200 = scalar_lea.vmem %s0, %s199
        %p201 = pneg %p40
        %p202 = pneg %p37
        %p203 = pneg %p61
        %p204 = pneg %p58
        %p205 = pneg %p82
        %p206 = pneg %p79
        %p207 = pneg %p103
        %p208 = pneg %p100
        %p209 = pneg %p124
        %p210 = pneg %p121
        %p211 = pneg %p150
        %p212 = pneg %p147
        %s213 = sand.u32 %s137, 1
        %s214 = scalar_lea.sflag [#allocation3], %s213
        %s215 = sand.u32 %s137, 1
        %s216 = smul.addr %s215, 32
        %s217 = scalar_lea.vmem [#allocation2], %s216
        %p218 = scmp.lt.s32.totalorder %s19, 1
        %s219 = scalar_select %p218, %s19, 1
        %s220 = smul.addr %s219, 8
        %s221 = smul.addr %s220, 8
        %s222 = scalar_lea.vmem %s0, %s221
        %v223 = vld [vmem:[%s222] sm:$0xff]
        %v224 = vld [vmem:[%s222 + $0x8] sm:$0xff]
        %v225 = vld [vmem:[%s222 + $0x10] sm:$0xff]
        %v226 = vld [vmem:[%s222 + $0x18] sm:$0xff]
        %v227 = vld [vmem:[%s222 + $0x20] sm:$0xff]
        %v228 = vld [vmem:[%s222 + $0x28] sm:$0xff]
        %v229 = vld [vmem:[%s222 + $0x30] sm:$0xff]
        %v230 = vld [vmem:[%s222 + $0x38] sm:$0xff]
        %v239 = vrot.slane %v223, 7
        %v240 = vrot.slane %v224, 7
        %v241 = vrot.slane %v225, 7
        %v242 = vrot.slane %v226, 7
        %v243 = vrot.slane %v227, 7
        %v244 = vrot.slane %v228, 7
        %v245 = vrot.slane %v229, 7
        %v246 = vrot.slane %v230, 7
        %vm255 = vcmask 1040384
        %v256 = vsel %vm255, 0.0, %v239
        %v257 = vsel %vm255, 0.0, %v240
        %v258 = vsel %vm255, 0.0, %v241
        %v259 = vsel %vm255, 0.0, %v242
        %v260 = vsel %vm255, 0.0, %v243
        %v261 = vsel %vm255, 0.0, %v244
        %v262 = vsel %vm255, 0.0, %v245
        %v263 = vsel %vm255, 0.0, %v246
        %v264 = vsel %vm255, %v239, 0.0
        %v265 = vsel %vm255, %v240, 0.0
        %v266 = vsel %vm255, %v241, 0.0
        %v267 = vsel %vm255, %v242, 0.0
        %v268 = vsel %vm255, %v243, 0.0
        %v269 = vsel %vm255, %v244, 0.0
        %v270 = vsel %vm255, %v245, 0.0
        %v271 = vsel %vm255, %v246, 0.0
        %vm289 = vcmask 1046528
        %v290 = vrot.slane 0.0, 1
        %v291 = vsel %vm289, %v290, %v290
        %v292 = vrot.slane %v256, 1
        %v293 = vrot.slane %v264, 1
        %v294 = vsel %vm289, %v292, %v293
        %v295 = vrot.slane %v257, 1
        %v296 = vrot.slane %v265, 1
        %v297 = vsel %vm289, %v295, %v296
        %v298 = vrot.slane %v258, 1
        %v299 = vrot.slane %v266, 1
        %v300 = vsel %vm289, %v298, %v299
        %v301 = vrot.slane %v259, 1
        %v302 = vrot.slane %v267, 1
        %v303 = vsel %vm289, %v301, %v302
        %v304 = vrot.slane %v260, 1
        %v305 = vrot.slane %v268, 1
        %v306 = vsel %vm289, %v304, %v305
        %v307 = vrot.slane %v261, 1
        %v308 = vrot.slane %v269, 1
        %v309 = vsel %vm289, %v307, %v308
        %v310 = vrot.slane %v262, 1
        %v311 = vrot.slane %v270, 1
        %v312 = vsel %vm289, %v310, %v311
        %v313 = vrot.slane %v263, 1
        %v314 = vrot.slane %v271, 1
        %v315 = vsel %vm289, %v313, %v314
        %316 = vrot.lane.b32.xlu0 %v291, 64
        %v317 = vpop.permute.xlu0 %316
        %318 = vrot.lane.b32.xlu0 %v294, 64
        %v319 = vpop.permute.xlu0 %318
        %320 = vrot.lane.b32.xlu0 %v297, 64
        %v321 = vpop.permute.xlu0 %320
        %322 = vrot.lane.b32.xlu0 %v300, 64
        %v323 = vpop.permute.xlu0 %322
        %324 = vrot.lane.b32.xlu0 %v303, 64
        %v325 = vpop.permute.xlu0 %324
        %326 = vrot.lane.b32.xlu0 %v306, 64
        %v327 = vpop.permute.xlu0 %326
        %328 = vrot.lane.b32.xlu0 %v309, 64
        %v329 = vpop.permute.xlu0 %328
        %330 = vrot.lane.b32.xlu0 %v312, 64
        %v331 = vpop.permute.xlu0 %330
        %332 = vrot.lane.b32.xlu0 %v315, 64
        %v333 = vpop.permute.xlu0 %332
        %vm343 = vcmask 1045504
        %v344 = vrot.slane 0.0, 2
        %v345 = vsel %vm343, %v344, %v344
        %v346 = vrot.slane %v256, 2
        %v347 = vrot.slane %v264, 2
        %v348 = vsel %vm343, %v346, %v347
        %v349 = vrot.slane %v257, 2
        %v350 = vrot.slane %v265, 2
        %v351 = vsel %vm343, %v349, %v350
        %v352 = vrot.slane %v258, 2
        %v353 = vrot.slane %v266, 2
        %v354 = vsel %vm343, %v352, %v353
        %v355 = vrot.slane %v259, 2
        %v356 = vrot.slane %v267, 2
        %v357 = vsel %vm343, %v355, %v356
        %v358 = vrot.slane %v260, 2
        %v359 = vrot.slane %v268, 2
        %v360 = vsel %vm343, %v358, %v359
        %v361 = vrot.slane %v261, 2
        %v362 = vrot.slane %v269, 2
        %v363 = vsel %vm343, %v361, %v362
        %v364 = vrot.slane %v262, 2
        %v365 = vrot.slane %v270, 2
        %v366 = vsel %vm343, %v364, %v365
        %v367 = vrot.slane %v263, 2
        %v368 = vrot.slane %v271, 2
        %v369 = vsel %vm343, %v367, %v368
        %vm378 = vcmask 523264
        %v379 = vsel %vm378, 0.0, %v317
        %v380 = vsel %vm378, %v256, %v319
        %v381 = vsel %vm378, %v257, %v321
        %v382 = vsel %vm378, %v258, %v323
        %v383 = vsel %vm378, %v259, %v325
        %v384 = vsel %vm378, %v260, %v327
        %v385 = vsel %vm378, %v261, %v329
        %v386 = vsel %vm378, %v262, %v331
        %v387 = vsel %vm378, %v263, %v333
        %396 = vrot.lane.b32.xlu0 %v380, 64
        %v397 = vpop.permute.xlu0 %396
        %398 = vrot.lane.b32.xlu0 %v348, 64
        %v399 = vpop.permute.xlu0 %398
        %400 = vrot.lane.b32.xlu0 %v381, 64
        %v401 = vpop.permute.xlu0 %400
        %402 = vrot.lane.b32.xlu0 %v351, 64
        %v403 = vpop.permute.xlu0 %402
        %404 = vrot.lane.b32.xlu0 %v382, 64
        %v405 = vpop.permute.xlu0 %404
        %406 = vrot.lane.b32.xlu0 %v354, 64
        %v407 = vpop.permute.xlu0 %406
        %408 = vrot.lane.b32.xlu0 %v383, 64
        %v409 = vpop.permute.xlu0 %408
        %410 = vrot.lane.b32.xlu0 %v357, 64
        %v411 = vpop.permute.xlu0 %410
        %412 = vrot.lane.b32.xlu0 %v384, 64
        %v413 = vpop.permute.xlu0 %412
        %414 = vrot.lane.b32.xlu0 %v360, 64
        %v415 = vpop.permute.xlu0 %414
        %416 = vrot.lane.b32.xlu0 %v385, 64
        %v417 = vpop.permute.xlu0 %416
        %418 = vrot.lane.b32.xlu0 %v363, 64
        %v419 = vpop.permute.xlu0 %418
        %420 = vrot.lane.b32.xlu0 %v386, 64
        %v421 = vpop.permute.xlu0 %420
        %422 = vrot.lane.b32.xlu0 %v366, 64
        %v423 = vpop.permute.xlu0 %422
        %424 = vrot.lane.b32.xlu0 %v387, 64
        %v425 = vpop.permute.xlu0 %424
        %426 = vrot.lane.b32.xlu0 %v369, 64
        %v427 = vpop.permute.xlu0 %426
        %v428 = vsel %vm378, %v397, %v399
        %v429 = vsel %vm378, %v401, %v403
        %v430 = vsel %vm378, %v405, %v407
        %v431 = vsel %vm378, %v409, %v411
        %v432 = vsel %vm378, %v413, %v415
        %v433 = vsel %vm378, %v417, %v419
        %v434 = vsel %vm378, %v421, %v423
        %v435 = vsel %vm378, %v425, %v427
        %v452 = vsel %vm378, %v345, %v397
        %v453 = vsel %vm378, %v348, %v401
        %v454 = vsel %vm378, %v351, %v405
        %v455 = vsel %vm378, %v354, %v409
        %v456 = vsel %vm378, %v357, %v413
        %v457 = vsel %vm378, %v360, %v417
        %v458 = vsel %vm378, %v363, %v421
        %v459 = vsel %vm378, %v366, %v425
        %v460 = vld [vmem:[%s1] sm:$0xff]
        %v461 = vld [vmem:[%s1 + $0x8] sm:$0xff]
        %v462 = vld [vmem:[%s1 + $0x10] sm:$0xff]
        %v463 = vld [vmem:[%s1 + $0x18] sm:$0xff]
        %v464 = vld [vmem:[%s1 + $0x20] sm:$0xff]
        %v465 = vld [vmem:[%s1 + $0x28] sm:$0xff]
        %v466 = vld [vmem:[%s1 + $0x30] sm:$0xff]
        %v467 = vld [vmem:[%s1 + $0x38] sm:$0xff]
        %v468 = vld [vmem:[%s1 + $0x40] sm:$0xff]
        %v469 = vld [vmem:[%s1 + $0x48] sm:$0xff]
        %v470 = vld [vmem:[%s1 + $0x50] sm:$0xff]
        %v471 = vld [vmem:[%s1 + $0x58] sm:$0xff]
        %v472 = vld [vmem:[%s1 + $0x60] sm:$0xff]
        %v473 = vld [vmem:[%s1 + $0x68] sm:$0xff]
        %v474 = vld [vmem:[%s1 + $0x70] sm:$0xff]
        %v475 = vld [vmem:[%s1 + $0x78] sm:$0xff]
        %v476 = vld [vmem:[%s1 + $0x80] sm:$0xff]
        %v477 = vld [vmem:[%s1 + $0x88] sm:$0xff]
        %v478 = vld [vmem:[%s1 + $0x90] sm:$0xff]
        %v479 = vld [vmem:[%s1 + $0x98] sm:$0xff]
        %v480 = vld [vmem:[%s1 + $0xa0] sm:$0xff]
        %v481 = vld [vmem:[%s1 + $0xa8] sm:$0xff]
        %v482 = vld [vmem:[%s1 + $0xb0] sm:$0xff]
        %v483 = vld [vmem:[%s1 + $0xb8] sm:$0xff]
        %v484 = vld [vmem:[%s1 + $0xc0] sm:$0xff]
        %v485 = vld [vmem:[%s1 + $0xc8] sm:$0xff]
        %v486 = vld [vmem:[%s1 + $0xd0] sm:$0xff]
        %v487 = vld [vmem:[%s1 + $0xd8] sm:$0xff]
        %v488 = vld [vmem:[%s1 + $0xe0] sm:$0xff]
        %v489 = vld [vmem:[%s1 + $0xe8] sm:$0xff]
        %v490 = vld [vmem:[%s1 + $0xf0] sm:$0xff]
        %v491 = vld [vmem:[%s1 + $0xf8] sm:$0xff]
        %v492 = vld [vmem:[%s1 + $0x100] sm:$0xff]
        %v493 = vld [vmem:[%s1 + $0x108] sm:$0xff]
        %v494 = vld [vmem:[%s1 + $0x110] sm:$0xff]
        %v495 = vld [vmem:[%s1 + $0x118] sm:$0xff]
        %v496 = vld [vmem:[%s1 + $0x120] sm:$0xff]
        %v497 = vld [vmem:[%s1 + $0x128] sm:$0xff]
        %v498 = vld [vmem:[%s1 + $0x130] sm:$0xff]
        %v499 = vld [vmem:[%s1 + $0x138] sm:$0xff]
        %v500 = vld [vmem:[%s1 + $0x140] sm:$0xff]
        %v501 = vld [vmem:[%s1 + $0x148] sm:$0xff]
        %v502 = vld [vmem:[%s1 + $0x150] sm:$0xff]
        %v503 = vld [vmem:[%s1 + $0x158] sm:$0xff]
        %v504 = vld [vmem:[%s1 + $0x160] sm:$0xff]
        %v505 = vld [vmem:[%s1 + $0x168] sm:$0xff]
        %v506 = vld [vmem:[%s1 + $0x170] sm:$0xff]
        %v507 = vld [vmem:[%s1 + $0x178] sm:$0xff]
        %v508 = vld [vmem:[%s1 + $0x180] sm:$0xff]
        %v509 = vld [vmem:[%s1 + $0x188] sm:$0xff]
        %v510 = vld [vmem:[%s1 + $0x190] sm:$0xff]
        %v511 = vld [vmem:[%s1 + $0x198] sm:$0xff]
        %v512 = vld [vmem:[%s1 + $0x1a0] sm:$0xff]
        %v513 = vld [vmem:[%s1 + $0x1a8] sm:$0xff]
        %v514 = vld [vmem:[%s1 + $0x1b0] sm:$0xff]
        %v515 = vld [vmem:[%s1 + $0x1b8] sm:$0xff]
        %v516 = vld [vmem:[%s1 + $0x1c0] sm:$0xff]
        %v517 = vld [vmem:[%s1 + $0x1c8] sm:$0xff]
        %v518 = vld [vmem:[%s1 + $0x1d0] sm:$0xff]
        %v519 = vld [vmem:[%s1 + $0x1d8] sm:$0xff]
        %v520 = vld [vmem:[%s1 + $0x1e0] sm:$0xff]
        %v521 = vld [vmem:[%s1 + $0x1e8] sm:$0xff]
        %v522 = vld [vmem:[%s1 + $0x1f0] sm:$0xff]
        %v523 = vld [vmem:[%s1 + $0x1f8] sm:$0xff]
        %v524 = vld [vmem:[%s1 + $0x200] sm:$0xff]
        %v525 = vld [vmem:[%s1 + $0x208] sm:$0xff]
        %v526 = vld [vmem:[%s1 + $0x210] sm:$0xff]
        %v527 = vld [vmem:[%s1 + $0x218] sm:$0xff]
        %v528 = vld [vmem:[%s1 + $0x220] sm:$0xff]
        %v529 = vld [vmem:[%s1 + $0x228] sm:$0xff]
        %v530 = vld [vmem:[%s1 + $0x230] sm:$0xff]
        %v531 = vld [vmem:[%s1 + $0x238] sm:$0xff]
        %v532 = vld [vmem:[%s2] sm:$0x1]
        %v534 = vperm.slane %v532, 0
        %v536 = vsel %vm378, %v351, 0
        %v538 = vsel %vm378, %v354, 0
        %v540 = vsel %vm378, %v357, 0
        %v542 = vsel %vm378, %v360, 0
        %v544 = vsel %vm378, %v363, 0
        %v546 = vsel %vm378, %v366, 0
        %v548 = vsel %vm378, %v369, 0
        %v550 = vsel %vm378, %v345, 0
        %552 = vmatpush.msra.mxu0 %v475
        %553 = vmatpush.msra.mxu0 %v474
        %554 = vmatpush.msra.mxu0 %v473
        %555 = vmatpush.msra.mxu0 %v472
        %556 = vmatpush.msra.mxu0 %v471
        %557 = vmatpush.msra.mxu0 %v470
        %558 = vmatpush.msra.mxu0 %v469
        %559 = vmatpush.msra.mxu0 %v468
        %560 = vmatpush.msra.mxu0 %v467
        %561 = vmatpush.msra.mxu0 %v466
        %562 = vmatpush.msra.mxu0 %v465
        %563 = vmatpush.msra.mxu0 %v464
        %564 = vmatpush.msra.mxu0 %v463
        %565 = vmatpush.msra.mxu0 %v462
        %566 = vmatpush.msra.mxu0 %v461
        %567 = vmatpush.msra.mxu0 %v460
        %568 = vmatmul.f32.gmra.mxu0 %v379
        %v569 = vpop.f32.mrf.mxu0
        %v570 = vadd.f32 %v534, %v569
        %571 = vmatmul.f32.gmra.mxu0 %v380
        %v572 = vpop.f32.mrf.mxu0
        %v573 = vadd.f32 %v534, %v572
        %574 = vmatmul.f32.gmra.mxu0 %v381
        %v575 = vpop.f32.mrf.mxu0
        %v576 = vadd.f32 %v534, %v575
        %577 = vmatmul.f32.gmra.mxu0 %v382
        %v578 = vpop.f32.mrf.mxu0
        %v579 = vadd.f32 %v534, %v578
        %580 = vmatmul.f32.gmra.mxu0 %v383
        %v581 = vpop.f32.mrf.mxu0
        %v582 = vadd.f32 %v534, %v581
        %583 = vmatmul.f32.gmra.mxu0 %v384
        %v584 = vpop.f32.mrf.mxu0
        %v585 = vadd.f32 %v534, %v584
        %586 = vmatmul.f32.gmra.mxu0 %v385
        %v587 = vpop.f32.mrf.mxu0
        %v588 = vadd.f32 %v534, %v587
        %589 = vmatmul.f32.gmra.mxu0 %v386
        %v590 = vpop.f32.mrf.mxu0
        %v591 = vadd.f32 %v534, %v590
        %592 = vdwg.mxu0
        %593 = vmatpush.msra.mxu0 %v491
        %594 = vmatpush.msra.mxu0 %v490
        %595 = vmatpush.msra.mxu0 %v489
        %596 = vmatpush.msra.mxu0 %v488
        %597 = vmatpush.msra.mxu0 %v487
        %598 = vmatpush.msra.mxu0 %v486
        %599 = vmatpush.msra.mxu0 %v485
        %600 = vmatpush.msra.mxu0 %v484
        %601 = vmatpush.msra.mxu0 %v483
        %602 = vmatpush.msra.mxu0 %v482
        %603 = vmatpush.msra.mxu0 %v481
        %604 = vmatpush.msra.mxu0 %v480
        %605 = vmatpush.msra.mxu0 %v479
        %606 = vmatpush.msra.mxu0 %v478
        %607 = vmatpush.msra.mxu0 %v477
        %608 = vmatpush.msra.mxu0 %v476
        %609 = vmatmul.f32.gmra.mxu0 %v452
        %v610 = vpop.f32.mrf.mxu0
        %v611 = vadd.f32 %v570, %v610
        %612 = vmatmul.f32.gmra.mxu0 %v453
        %v613 = vpop.f32.mrf.mxu0
        %v614 = vadd.f32 %v573, %v613
        %615 = vmatmul.f32.gmra.mxu0 %v454
        %v616 = vpop.f32.mrf.mxu0
        %v617 = vadd.f32 %v576, %v616
        %618 = vmatmul.f32.gmra.mxu0 %v455
        %v619 = vpop.f32.mrf.mxu0
        %v620 = vadd.f32 %v579, %v619
        %621 = vmatmul.f32.gmra.mxu0 %v456
        %v622 = vpop.f32.mrf.mxu0
        %v623 = vadd.f32 %v582, %v622
        %624 = vmatmul.f32.gmra.mxu0 %v457
        %v625 = vpop.f32.mrf.mxu0
        %v626 = vadd.f32 %v585, %v625
        %627 = vmatmul.f32.gmra.mxu0 %v458
        %v628 = vpop.f32.mrf.mxu0
        %v629 = vadd.f32 %v588, %v628
        %630 = vmatmul.f32.gmra.mxu0 %v459
        %v631 = vpop.f32.mrf.mxu0
        %v632 = vadd.f32 %v591, %v631
        %633 = vdwg.mxu0
        %634 = vmatpush.msra.mxu0 %v507
        %635 = vmatpush.msra.mxu0 %v506
        %636 = vmatpush.msra.mxu0 %v505
        %637 = vmatpush.msra.mxu0 %v504
        %638 = vmatpush.msra.mxu0 %v503
        %639 = vmatpush.msra.mxu0 %v502
        %640 = vmatpush.msra.mxu0 %v501
        %641 = vmatpush.msra.mxu0 %v500
        %642 = vmatpush.msra.mxu0 %v499
        %643 = vmatpush.msra.mxu0 %v498
        %644 = vmatpush.msra.mxu0 %v497
        %645 = vmatpush.msra.mxu0 %v496
        %646 = vmatpush.msra.mxu0 %v495
        %647 = vmatpush.msra.mxu0 %v494
        %648 = vmatpush.msra.mxu0 %v493
        %649 = vmatpush.msra.mxu0 %v492
        %650 = vmatmul.f32.gmra.mxu0 %v428
        %v651 = vpop.f32.mrf.mxu0
        %v652 = vadd.f32 %v611, %v651
        %653 = vmatmul.f32.gmra.mxu0 %v429
        %v654 = vpop.f32.mrf.mxu0
        %v655 = vadd.f32 %v614, %v654
        %656 = vmatmul.f32.gmra.mxu0 %v430
        %v657 = vpop.f32.mrf.mxu0
        %v658 = vadd.f32 %v617, %v657
        %659 = vmatmul.f32.gmra.mxu0 %v431
        %v660 = vpop.f32.mrf.mxu0
        %v661 = vadd.f32 %v620, %v660
        %662 = vmatmul.f32.gmra.mxu0 %v432
        %v663 = vpop.f32.mrf.mxu0
        %v664 = vadd.f32 %v623, %v663
        %665 = vmatmul.f32.gmra.mxu0 %v433
        %v666 = vpop.f32.mrf.mxu0
        %v667 = vadd.f32 %v626, %v666
        %668 = vmatmul.f32.gmra.mxu0 %v434
        %v669 = vpop.f32.mrf.mxu0
        %v670 = vadd.f32 %v629, %v669
        %671 = vmatmul.f32.gmra.mxu0 %v435
        %v672 = vpop.f32.mrf.mxu0
        %v673 = vadd.f32 %v632, %v672
        %674 = vdwg.mxu0
        %675 = vmatpush.msra.mxu0 %v523
        %676 = vmatpush.msra.mxu0 %v522
        %677 = vmatpush.msra.mxu0 %v521
        %678 = vmatpush.msra.mxu0 %v520
        %679 = vmatpush.msra.mxu0 %v519
        %680 = vmatpush.msra.mxu0 %v518
        %681 = vmatpush.msra.mxu0 %v517
        %682 = vmatpush.msra.mxu0 %v516
        %683 = vmatpush.msra.mxu0 %v515
        %684 = vmatpush.msra.mxu0 %v514
        %685 = vmatpush.msra.mxu0 %v513
        %686 = vmatpush.msra.mxu0 %v512
        %687 = vmatpush.msra.mxu0 %v511
        %688 = vmatpush.msra.mxu0 %v510
        %689 = vmatpush.msra.mxu0 %v509
        %690 = vmatpush.msra.mxu0 %v508
        %691 = vmatmul.f32.gmra.mxu0 %v381
        %v692 = vpop.f32.mrf.mxu0
        %v693 = vadd.f32 %v652, %v692
        %694 = vmatmul.f32.gmra.mxu0 %v382
        %v695 = vpop.f32.mrf.mxu0
        %v696 = vadd.f32 %v655, %v695
        %697 = vmatmul.f32.gmra.mxu0 %v383
        %v698 = vpop.f32.mrf.mxu0
        %v699 = vadd.f32 %v658, %v698
        %700 = vmatmul.f32.gmra.mxu0 %v384
        %v701 = vpop.f32.mrf.mxu0
        %v702 = vadd.f32 %v661, %v701
        %703 = vmatmul.f32.gmra.mxu0 %v385
        %v704 = vpop.f32.mrf.mxu0
        %v705 = vadd.f32 %v664, %v704
        %706 = vmatmul.f32.gmra.mxu0 %v386
        %v707 = vpop.f32.mrf.mxu0
        %v708 = vadd.f32 %v667, %v707
        %709 = vmatmul.f32.gmra.mxu0 %v387
        %v710 = vpop.f32.mrf.mxu0
        %v711 = vadd.f32 %v670, %v710
        %712 = vmatmul.f32.gmra.mxu0 %v379
        %v713 = vpop.f32.mrf.mxu0
        %v714 = vadd.f32 %v673, %v713
        %715 = vdwg.mxu0
        %716 = vmatpush.msra.mxu0 0.0
        %717 = vmatpush.msra.mxu0 0.0
        %718 = vmatpush.msra.mxu0 0.0
        %719 = vmatpush.msra.mxu0 0.0
        %720 = vmatpush.msra.mxu0 0.0
        %721 = vmatpush.msra.mxu0 0.0
        %722 = vmatpush.msra.mxu0 0.0
        %723 = vmatpush.msra.mxu0 0.0
        %724 = vmatpush.msra.mxu0 %v531
        %725 = vmatpush.msra.mxu0 %v530
        %726 = vmatpush.msra.mxu0 %v529
        %727 = vmatpush.msra.mxu0 %v528
        %728 = vmatpush.msra.mxu0 %v527
        %729 = vmatpush.msra.mxu0 %v526
        %730 = vmatpush.msra.mxu0 %v525
        %731 = vmatpush.msra.mxu0 %v524
        %732 = vmatmul.f32.gmra.mxu0 %v536
        %v733 = vpop.f32.mrf.mxu0
        %v734 = vadd.f32 %v693, %v733
        %735 = vmatmul.f32.gmra.mxu0 %v538
        %v736 = vpop.f32.mrf.mxu0
        %v737 = vadd.f32 %v696, %v736
        %738 = vmatmul.f32.gmra.mxu0 %v540
        %v739 = vpop.f32.mrf.mxu0
        %v740 = vadd.f32 %v699, %v739
        %741 = vmatmul.f32.gmra.mxu0 %v542
        %v742 = vpop.f32.mrf.mxu0
        %v743 = vadd.f32 %v702, %v742
        %744 = vmatmul.f32.gmra.mxu0 %v544
        %v745 = vpop.f32.mrf.mxu0
        %v746 = vadd.f32 %v705, %v745
        %747 = vmatmul.f32.gmra.mxu0 %v546
        %v748 = vpop.f32.mrf.mxu0
        %v749 = vadd.f32 %v708, %v748
        %750 = vmatmul.f32.gmra.mxu0 %v548
        %v751 = vpop.f32.mrf.mxu0
        %v752 = vadd.f32 %v711, %v751
        %753 = vmatmul.f32.gmra.mxu0 %v550
        %v754 = vpop.f32.mrf.mxu0
        %v755 = vadd.f32 %v714, %v754
        %756 = vdwg.mxu0
        %vm757 = vcmp.ge.f32.partialorder %v734, 0.0
        %vm758 = vcmp.ge.f32.partialorder %v737, 0.0
        %vm759 = vcmp.ge.f32.partialorder %v740, 0.0
        %vm760 = vcmp.ge.f32.partialorder %v743, 0.0
        %vm761 = vcmp.ge.f32.partialorder %v746, 0.0
        %vm762 = vcmp.ge.f32.partialorder %v749, 0.0
        %vm763 = vcmp.ge.f32.partialorder %v752, 0.0
        %vm764 = vcmp.ge.f32.partialorder %v755, 0.0
        %v765 = vmul.f32 %v734, 0.2
        %v766 = vmul.f32 %v737, 0.2
        %v767 = vmul.f32 %v740, 0.2
        %v768 = vmul.f32 %v743, 0.2
        %v769 = vmul.f32 %v746, 0.2
        %v770 = vmul.f32 %v749, 0.2
        %v771 = vmul.f32 %v752, 0.2
        %v772 = vmul.f32 %v755, 0.2
        %v773 = vsel %vm757, %v734, %v765
        %v774 = vsel %vm758, %v737, %v766
        %v775 = vsel %vm759, %v740, %v767
        %v776 = vsel %vm760, %v743, %v768
        %v777 = vsel %vm761, %v746, %v769
        %v778 = vsel %vm762, %v749, %v770
        %v779 = vsel %vm763, %v752, %v771
        %v780 = vsel %vm764, %v755, %v772
        %v789 = vrot.slane %v773, 7
        %v790 = vrot.slane %v774, 7
        %v791 = vrot.slane %v775, 7
        %v792 = vrot.slane %v776, 7
        %v793 = vrot.slane %v777, 7
        %v794 = vrot.slane %v778, 7
        %v795 = vrot.slane %v779, 7
        %v796 = vrot.slane %v780, 7
        %v805 = vsel %vm255, 0.0, %v789
        %v806 = vsel %vm255, 0.0, %v790
        %v807 = vsel %vm255, 0.0, %v791
        %v808 = vsel %vm255, 0.0, %v792
        %v809 = vsel %vm255, 0.0, %v793
        %v810 = vsel %vm255, 0.0, %v794
        %v811 = vsel %vm255, 0.0, %v795
        %v812 = vsel %vm255, 0.0, %v796
        %v813 = vsel %vm255, %v789, 0.0
        %v814 = vsel %vm255, %v790, 0.0
        %v815 = vsel %vm255, %v791, 0.0
        %v816 = vsel %vm255, %v792, 0.0
        %v817 = vsel %vm255, %v793, 0.0
        %v818 = vsel %vm255, %v794, 0.0
        %v819 = vsel %vm255, %v795, 0.0
        %v820 = vsel %vm255, %v796, 0.0
        %v837 = vrot.slane %v805, 1
        %v838 = vrot.slane %v813, 1
        %v839 = vsel %vm289, %v837, %v838
        %v840 = vrot.slane %v806, 1
        %v841 = vrot.slane %v814, 1
        %v842 = vsel %vm289, %v840, %v841
        %v843 = vrot.slane %v807, 1
        %v844 = vrot.slane %v815, 1
        %v845 = vsel %vm289, %v843, %v844
        %v846 = vrot.slane %v808, 1
        %v847 = vrot.slane %v816, 1
        %v848 = vsel %vm289, %v846, %v847
        %v849 = vrot.slane %v809, 1
        %v850 = vrot.slane %v817, 1
        %v851 = vsel %vm289, %v849, %v850
        %v852 = vrot.slane %v810, 1
        %v853 = vrot.slane %v818, 1
        %v854 = vsel %vm289, %v852, %v853
        %v855 = vrot.slane %v811, 1
        %v856 = vrot.slane %v819, 1
        %v857 = vsel %vm289, %v855, %v856
        %v858 = vrot.slane %v812, 1
        %v859 = vrot.slane %v820, 1
        %v860 = vsel %vm289, %v858, %v859
        %861 = vrot.lane.b32.xlu0 %v839, 64
        %v862 = vpop.permute.xlu0 %861
        %863 = vrot.lane.b32.xlu0 %v842, 64
        %v864 = vpop.permute.xlu0 %863
        %865 = vrot.lane.b32.xlu0 %v845, 64
        %v866 = vpop.permute.xlu0 %865
        %867 = vrot.lane.b32.xlu0 %v848, 64
        %v868 = vpop.permute.xlu0 %867
        %869 = vrot.lane.b32.xlu0 %v851, 64
        %v870 = vpop.permute.xlu0 %869
        %871 = vrot.lane.b32.xlu0 %v854, 64
        %v872 = vpop.permute.xlu0 %871
        %873 = vrot.lane.b32.xlu0 %v857, 64
        %v874 = vpop.permute.xlu0 %873
        %875 = vrot.lane.b32.xlu0 %v860, 64
        %v876 = vpop.permute.xlu0 %875
        %v885 = vrot.slane %v805, 2
        %v886 = vrot.slane %v813, 2
        %v887 = vsel %vm343, %v885, %v886
        %v888 = vrot.slane %v806, 2
        %v889 = vrot.slane %v814, 2
        %v890 = vsel %vm343, %v888, %v889
        %v891 = vrot.slane %v807, 2
        %v892 = vrot.slane %v815, 2
        %v893 = vsel %vm343, %v891, %v892
        %v894 = vrot.slane %v808, 2
        %v895 = vrot.slane %v816, 2
        %v896 = vsel %vm343, %v894, %v895
        %v897 = vrot.slane %v809, 2
        %v898 = vrot.slane %v817, 2
        %v899 = vsel %vm343, %v897, %v898
        %v900 = vrot.slane %v810, 2
        %v901 = vrot.slane %v818, 2
        %v902 = vsel %vm343, %v900, %v901
        %v903 = vrot.slane %v811, 2
        %v904 = vrot.slane %v819, 2
        %v905 = vsel %vm343, %v903, %v904
        %v906 = vrot.slane %v812, 2
        %v907 = vrot.slane %v820, 2
        %v908 = vsel %vm343, %v906, %v907
        %v916 = vsel %vm378, %v805, %v862
        %v917 = vsel %vm378, %v806, %v864
        %v918 = vsel %vm378, %v807, %v866
        %v919 = vsel %vm378, %v808, %v868
        %v920 = vsel %vm378, %v809, %v870
        %v921 = vsel %vm378, %v810, %v872
        %v922 = vsel %vm378, %v811, %v874
        %v923 = vsel %vm378, %v812, %v876
        %932 = vrot.lane.b32.xlu0 %v916, 64
        %v933 = vpop.permute.xlu0 %932
        %934 = vrot.lane.b32.xlu0 %v887, 64
        %v935 = vpop.permute.xlu0 %934
        %936 = vrot.lane.b32.xlu0 %v917, 64
        %v937 = vpop.permute.xlu0 %936
        %938 = vrot.lane.b32.xlu0 %v890, 64
        %v939 = vpop.permute.xlu0 %938
        %940 = vrot.lane.b32.xlu0 %v918, 64
        %v941 = vpop.permute.xlu0 %940
        %942 = vrot.lane.b32.xlu0 %v893, 64
        %v943 = vpop.permute.xlu0 %942
        %944 = vrot.lane.b32.xlu0 %v919, 64
        %v945 = vpop.permute.xlu0 %944
        %946 = vrot.lane.b32.xlu0 %v896, 64
        %v947 = vpop.permute.xlu0 %946
        %948 = vrot.lane.b32.xlu0 %v920, 64
        %v949 = vpop.permute.xlu0 %948
        %950 = vrot.lane.b32.xlu0 %v899, 64
        %v951 = vpop.permute.xlu0 %950
        %952 = vrot.lane.b32.xlu0 %v921, 64
        %v953 = vpop.permute.xlu0 %952
        %954 = vrot.lane.b32.xlu0 %v902, 64
        %v955 = vpop.permute.xlu0 %954
        %956 = vrot.lane.b32.xlu0 %v922, 64
        %v957 = vpop.permute.xlu0 %956
        %958 = vrot.lane.b32.xlu0 %v905, 64
        %v959 = vpop.permute.xlu0 %958
        %960 = vrot.lane.b32.xlu0 %v923, 64
        %v961 = vpop.permute.xlu0 %960
        %962 = vrot.lane.b32.xlu0 %v908, 64
        %v963 = vpop.permute.xlu0 %962
        %v964 = vsel %vm378, %v933, %v935
        %v965 = vsel %vm378, %v937, %v939
        %v966 = vsel %vm378, %v941, %v943
        %v967 = vsel %vm378, %v945, %v947
        %v968 = vsel %vm378, %v949, %v951
        %v969 = vsel %vm378, %v953, %v955
        %v970 = vsel %vm378, %v957, %v959
        %v971 = vsel %vm378, %v961, %v963
        %v988 = vsel %vm378, %v345, %v933
        %v989 = vsel %vm378, %v887, %v937
        %v990 = vsel %vm378, %v890, %v941
        %v991 = vsel %vm378, %v893, %v945
        %v992 = vsel %vm378, %v896, %v949
        %v993 = vsel %vm378, %v899, %v953
        %v994 = vsel %vm378, %v902, %v957
        %v995 = vsel %vm378, %v905, %v961
        %v996 = vld [vmem:[%s3] sm:$0xff]
        %v997 = vld [vmem:[%s3 + $0x8] sm:$0xff]
        %v998 = vld [vmem:[%s3 + $0x10] sm:$0xff]
        %v999 = vld [vmem:[%s3 + $0x18] sm:$0xff]
        %v1000 = vld [vmem:[%s3 + $0x20] sm:$0xff]
        %v1001 = vld [vmem:[%s3 + $0x28] sm:$0xff]
        %v1002 = vld [vmem:[%s3 + $0x30] sm:$0xff]
        %v1003 = vld [vmem:[%s3 + $0x38] sm:$0xff]
        %v1004 = vld [vmem:[%s3 + $0x40] sm:$0xff]
        %v1005 = vld [vmem:[%s3 + $0x48] sm:$0xff]
        %v1006 = vld [vmem:[%s3 + $0x50] sm:$0xff]
        %v1007 = vld [vmem:[%s3 + $0x58] sm:$0xff]
        %v1008 = vld [vmem:[%s3 + $0x60] sm:$0xff]
        %v1009 = vld [vmem:[%s3 + $0x68] sm:$0xff]
        %v1010 = vld [vmem:[%s3 + $0x70] sm:$0xff]
        %v1011 = vld [vmem:[%s3 + $0x78] sm:$0xff]
        %v1012 = vld [vmem:[%s3 + $0x80] sm:$0xff]
        %v1013 = vld [vmem:[%s3 + $0x88] sm:$0xff]
        %v1014 = vld [vmem:[%s3 + $0x90] sm:$0xff]
        %v1015 = vld [vmem:[%s3 + $0x98] sm:$0xff]
        %v1016 = vld [vmem:[%s3 + $0xa0] sm:$0xff]
        %v1017 = vld [vmem:[%s3 + $0xa8] sm:$0xff]
        %v1018 = vld [vmem:[%s3 + $0xb0] sm:$0xff]
        %v1019 = vld [vmem:[%s3 + $0xb8] sm:$0xff]
        %v1020 = vld [vmem:[%s3 + $0xc0] sm:$0xff]
        %v1021 = vld [vmem:[%s3 + $0xc8] sm:$0xff]
        %v1022 = vld [vmem:[%s3 + $0xd0] sm:$0xff]
        %v1023 = vld [vmem:[%s3 + $0xd8] sm:$0xff]
        %v1024 = vld [vmem:[%s3 + $0xe0] sm:$0xff]
        %v1025 = vld [vmem:[%s3 + $0xe8] sm:$0xff]
        %v1026 = vld [vmem:[%s3 + $0xf0] sm:$0xff]
        %v1027 = vld [vmem:[%s3 + $0xf8] sm:$0xff]
        %v1028 = vld [vmem:[%s3 + $0x100] sm:$0xff]
        %v1029 = vld [vmem:[%s3 + $0x108] sm:$0xff]
        %v1030 = vld [vmem:[%s3 + $0x110] sm:$0xff]
        %v1031 = vld [vmem:[%s3 + $0x118] sm:$0xff]
        %v1032 = vld [vmem:[%s3 + $0x120] sm:$0xff]
        %v1033 = vld [vmem:[%s3 + $0x128] sm:$0xff]
        %v1034 = vld [vmem:[%s3 + $0x130] sm:$0xff]
        %v1035 = vld [vmem:[%s3 + $0x138] sm:$0xff]
        %v1036 = vld [vmem:[%s3 + $0x140] sm:$0xff]
        %v1037 = vld [vmem:[%s3 + $0x148] sm:$0xff]
        %v1038 = vld [vmem:[%s3 + $0x150] sm:$0xff]
        %v1039 = vld [vmem:[%s3 + $0x158] sm:$0xff]
        %v1040 = vld [vmem:[%s3 + $0x160] sm:$0xff]
        %v1041 = vld [vmem:[%s3 + $0x168] sm:$0xff]
        %v1042 = vld [vmem:[%s3 + $0x170] sm:$0xff]
        %v1043 = vld [vmem:[%s3 + $0x178] sm:$0xff]
        %v1044 = vld [vmem:[%s3 + $0x180] sm:$0xff]
        %v1045 = vld [vmem:[%s3 + $0x188] sm:$0xff]
        %v1046 = vld [vmem:[%s3 + $0x190] sm:$0xff]
        %v1047 = vld [vmem:[%s3 + $0x198] sm:$0xff]
        %v1048 = vld [vmem:[%s3 + $0x1a0] sm:$0xff]
        %v1049 = vld [vmem:[%s3 + $0x1a8] sm:$0xff]
        %v1050 = vld [vmem:[%s3 + $0x1b0] sm:$0xff]
        %v1051 = vld [vmem:[%s3 + $0x1b8] sm:$0xff]
        %v1052 = vld [vmem:[%s3 + $0x1c0] sm:$0xff]
        %v1053 = vld [vmem:[%s3 + $0x1c8] sm:$0xff]
        %v1054 = vld [vmem:[%s3 + $0x1d0] sm:$0xff]
        %v1055 = vld [vmem:[%s3 + $0x1d8] sm:$0xff]
        %v1056 = vld [vmem:[%s3 + $0x1e0] sm:$0xff]
        %v1057 = vld [vmem:[%s3 + $0x1e8] sm:$0xff]
        %v1058 = vld [vmem:[%s3 + $0x1f0] sm:$0xff]
        %v1059 = vld [vmem:[%s3 + $0x1f8] sm:$0xff]
        %v1060 = vld [vmem:[%s3 + $0x200] sm:$0xff]
        %v1061 = vld [vmem:[%s3 + $0x208] sm:$0xff]
        %v1062 = vld [vmem:[%s3 + $0x210] sm:$0xff]
        %v1063 = vld [vmem:[%s3 + $0x218] sm:$0xff]
        %v1064 = vld [vmem:[%s3 + $0x220] sm:$0xff]
        %v1065 = vld [vmem:[%s3 + $0x228] sm:$0xff]
        %v1066 = vld [vmem:[%s3 + $0x230] sm:$0xff]
        %v1067 = vld [vmem:[%s3 + $0x238] sm:$0xff]
        %v1068 = vld [vmem:[%s4] sm:$0x1]
        %v1070 = vperm.slane %v1068, 0
        %v1072 = vsel %vm378, %v890, 0
        %v1074 = vsel %vm378, %v893, 0
        %v1076 = vsel %vm378, %v896, 0
        %v1078 = vsel %vm378, %v899, 0
        %v1080 = vsel %vm378, %v902, 0
        %v1082 = vsel %vm378, %v905, 0
        %v1084 = vsel %vm378, %v908, 0
        %1086 = vmatpush.msra.mxu0 %v1011
        %1087 = vmatpush.msra.mxu0 %v1010
        %1088 = vmatpush.msra.mxu0 %v1009
        %1089 = vmatpush.msra.mxu0 %v1008
        %1090 = vmatpush.msra.mxu0 %v1007
        %1091 = vmatpush.msra.mxu0 %v1006
        %1092 = vmatpush.msra.mxu0 %v1005
        %1093 = vmatpush.msra.mxu0 %v1004
        %1094 = vmatpush.msra.mxu0 %v1003
        %1095 = vmatpush.msra.mxu0 %v1002
        %1096 = vmatpush.msra.mxu0 %v1001
        %1097 = vmatpush.msra.mxu0 %v1000
        %1098 = vmatpush.msra.mxu0 %v999
        %1099 = vmatpush.msra.mxu0 %v998
        %1100 = vmatpush.msra.mxu0 %v997
        %1101 = vmatpush.msra.mxu0 %v996
        %1102 = vmatmul.f32.gmra.mxu0 %v379
        %v1103 = vpop.f32.mrf.mxu0
        %v1104 = vadd.f32 %v1070, %v1103
        %1105 = vmatmul.f32.gmra.mxu0 %v916
        %v1106 = vpop.f32.mrf.mxu0
        %v1107 = vadd.f32 %v1070, %v1106
        %1108 = vmatmul.f32.gmra.mxu0 %v917
        %v1109 = vpop.f32.mrf.mxu0
        %v1110 = vadd.f32 %v1070, %v1109
        %1111 = vmatmul.f32.gmra.mxu0 %v918
        %v1112 = vpop.f32.mrf.mxu0
        %v1113 = vadd.f32 %v1070, %v1112
        %1114 = vmatmul.f32.gmra.mxu0 %v919
        %v1115 = vpop.f32.mrf.mxu0
        %v1116 = vadd.f32 %v1070, %v1115
        %1117 = vmatmul.f32.gmra.mxu0 %v920
        %v1118 = vpop.f32.mrf.mxu0
        %v1119 = vadd.f32 %v1070, %v1118
        %1120 = vmatmul.f32.gmra.mxu0 %v921
        %v1121 = vpop.f32.mrf.mxu0
        %v1122 = vadd.f32 %v1070, %v1121
        %1123 = vmatmul.f32.gmra.mxu0 %v922
        %v1124 = vpop.f32.mrf.mxu0
        %v1125 = vadd.f32 %v1070, %v1124
        %1126 = vdwg.mxu0
        %1127 = vmatpush.msra.mxu0 %v1027
        %1128 = vmatpush.msra.mxu0 %v1026
        %1129 = vmatpush.msra.mxu0 %v1025
        %1130 = vmatpush.msra.mxu0 %v1024
        %1131 = vmatpush.msra.mxu0 %v1023
        %1132 = vmatpush.msra.mxu0 %v1022
        %1133 = vmatpush.msra.mxu0 %v1021
        %1134 = vmatpush.msra.mxu0 %v1020
        %1135 = vmatpush.msra.mxu0 %v1019
        %1136 = vmatpush.msra.mxu0 %v1018
        %1137 = vmatpush.msra.mxu0 %v1017
        %1138 = vmatpush.msra.mxu0 %v1016
        %1139 = vmatpush.msra.mxu0 %v1015
        %1140 = vmatpush.msra.mxu0 %v1014
        %1141 = vmatpush.msra.mxu0 %v1013
        %1142 = vmatpush.msra.mxu0 %v1012
        %1143 = vmatmul.f32.gmra.mxu0 %v988
        %v1144 = vpop.f32.mrf.mxu0
        %v1145 = vadd.f32 %v1104, %v1144
        %1146 = vmatmul.f32.gmra.mxu0 %v989
        %v1147 = vpop.f32.mrf.mxu0
        %v1148 = vadd.f32 %v1107, %v1147
        %1149 = vmatmul.f32.gmra.mxu0 %v990
        %v1150 = vpop.f32.mrf.mxu0
        %v1151 = vadd.f32 %v1110, %v1150
        %1152 = vmatmul.f32.gmra.mxu0 %v991
        %v1153 = vpop.f32.mrf.mxu0
        %v1154 = vadd.f32 %v1113, %v1153
        %1155 = vmatmul.f32.gmra.mxu0 %v992
        %v1156 = vpop.f32.mrf.mxu0
        %v1157 = vadd.f32 %v1116, %v1156
        %1158 = vmatmul.f32.gmra.mxu0 %v993
        %v1159 = vpop.f32.mrf.mxu0
        %v1160 = vadd.f32 %v1119, %v1159
        %1161 = vmatmul.f32.gmra.mxu0 %v994
        %v1162 = vpop.f32.mrf.mxu0
        %v1163 = vadd.f32 %v1122, %v1162
        %1164 = vmatmul.f32.gmra.mxu0 %v995
        %v1165 = vpop.f32.mrf.mxu0
        %v1166 = vadd.f32 %v1125, %v1165
        %1167 = vdwg.mxu0
        %1168 = vmatpush.msra.mxu0 %v1043
        %1169 = vmatpush.msra.mxu0 %v1042
        %1170 = vmatpush.msra.mxu0 %v1041
        %1171 = vmatpush.msra.mxu0 %v1040
        %1172 = vmatpush.msra.mxu0 %v1039
        %1173 = vmatpush.msra.mxu0 %v1038
        %1174 = vmatpush.msra.mxu0 %v1037
        %1175 = vmatpush.msra.mxu0 %v1036
        %1176 = vmatpush.msra.mxu0 %v1035
        %1177 = vmatpush.msra.mxu0 %v1034
        %1178 = vmatpush.msra.mxu0 %v1033
        %1179 = vmatpush.msra.mxu0 %v1032
        %1180 = vmatpush.msra.mxu0 %v1031
        %1181 = vmatpush.msra.mxu0 %v1030
        %1182 = vmatpush.msra.mxu0 %v1029
        %1183 = vmatpush.msra.mxu0 %v1028
        %1184 = vmatmul.f32.gmra.mxu0 %v964
        %v1185 = vpop.f32.mrf.mxu0
        %v1186 = vadd.f32 %v1145, %v1185
        %1187 = vmatmul.f32.gmra.mxu0 %v965
        %v1188 = vpop.f32.mrf.mxu0
        %v1189 = vadd.f32 %v1148, %v1188
        %1190 = vmatmul.f32.gmra.mxu0 %v966
        %v1191 = vpop.f32.mrf.mxu0
        %v1192 = vadd.f32 %v1151, %v1191
        %1193 = vmatmul.f32.gmra.mxu0 %v967
        %v1194 = vpop.f32.mrf.mxu0
        %v1195 = vadd.f32 %v1154, %v1194
        %1196 = vmatmul.f32.gmra.mxu0 %v968
        %v1197 = vpop.f32.mrf.mxu0
        %v1198 = vadd.f32 %v1157, %v1197
        %1199 = vmatmul.f32.gmra.mxu0 %v969
        %v1200 = vpop.f32.mrf.mxu0
        %v1201 = vadd.f32 %v1160, %v1200
        %1202 = vmatmul.f32.gmra.mxu0 %v970
        %v1203 = vpop.f32.mrf.mxu0
        %v1204 = vadd.f32 %v1163, %v1203
        %1205 = vmatmul.f32.gmra.mxu0 %v971
        %v1206 = vpop.f32.mrf.mxu0
        %v1207 = vadd.f32 %v1166, %v1206
        %1208 = vdwg.mxu0
        %1209 = vmatpush.msra.mxu0 %v1059
        %1210 = vmatpush.msra.mxu0 %v1058
        %1211 = vmatpush.msra.mxu0 %v1057
        %1212 = vmatpush.msra.mxu0 %v1056
        %1213 = vmatpush.msra.mxu0 %v1055
        %1214 = vmatpush.msra.mxu0 %v1054
        %1215 = vmatpush.msra.mxu0 %v1053
        %1216 = vmatpush.msra.mxu0 %v1052
        %1217 = vmatpush.msra.mxu0 %v1051
        %1218 = vmatpush.msra.mxu0 %v1050
        %1219 = vmatpush.msra.mxu0 %v1049
        %1220 = vmatpush.msra.mxu0 %v1048
        %1221 = vmatpush.msra.mxu0 %v1047
        %1222 = vmatpush.msra.mxu0 %v1046
        %1223 = vmatpush.msra.mxu0 %v1045
        %1224 = vmatpush.msra.mxu0 %v1044
        %1225 = vmatmul.f32.gmra.mxu0 %v917
        %v1226 = vpop.f32.mrf.mxu0
        %v1227 = vadd.f32 %v1186, %v1226
        %1228 = vmatmul.f32.gmra.mxu0 %v918
        %v1229 = vpop.f32.mrf.mxu0
        %v1230 = vadd.f32 %v1189, %v1229
        %1231 = vmatmul.f32.gmra.mxu0 %v919
        %v1232 = vpop.f32.mrf.mxu0
        %v1233 = vadd.f32 %v1192, %v1232
        %1234 = vmatmul.f32.gmra.mxu0 %v920
        %v1235 = vpop.f32.mrf.mxu0
        %v1236 = vadd.f32 %v1195, %v1235
        %1237 = vmatmul.f32.gmra.mxu0 %v921
        %v1238 = vpop.f32.mrf.mxu0
        %v1239 = vadd.f32 %v1198, %v1238
        %1240 = vmatmul.f32.gmra.mxu0 %v922
        %v1241 = vpop.f32.mrf.mxu0
        %v1242 = vadd.f32 %v1201, %v1241
        %1243 = vmatmul.f32.gmra.mxu0 %v923
        %v1244 = vpop.f32.mrf.mxu0
        %v1245 = vadd.f32 %v1204, %v1244
        %1246 = vmatmul.f32.gmra.mxu0 %v379
        %v1247 = vpop.f32.mrf.mxu0
        %v1248 = vadd.f32 %v1207, %v1247
        %1249 = vdwg.mxu0
        %1250 = vmatpush.msra.mxu0 0.0
        %1251 = vmatpush.msra.mxu0 0.0
        %1252 = vmatpush.msra.mxu0 0.0
        %1253 = vmatpush.msra.mxu0 0.0
        %1254 = vmatpush.msra.mxu0 0.0
        %1255 = vmatpush.msra.mxu0 0.0
        %1256 = vmatpush.msra.mxu0 0.0
        %1257 = vmatpush.msra.mxu0 0.0
        %1258 = vmatpush.msra.mxu0 %v1067
        %1259 = vmatpush.msra.mxu0 %v1066
        %1260 = vmatpush.msra.mxu0 %v1065
        %1261 = vmatpush.msra.mxu0 %v1064
        %1262 = vmatpush.msra.mxu0 %v1063
        %1263 = vmatpush.msra.mxu0 %v1062
        %1264 = vmatpush.msra.mxu0 %v1061
        %1265 = vmatpush.msra.mxu0 %v1060
        %1266 = vmatmul.f32.gmra.mxu0 %v1072
        %v1267 = vpop.f32.mrf.mxu0
        %v1268 = vadd.f32 %v1227, %v1267
        %1269 = vmatmul.f32.gmra.mxu0 %v1074
        %v1270 = vpop.f32.mrf.mxu0
        %v1271 = vadd.f32 %v1230, %v1270
        %1272 = vmatmul.f32.gmra.mxu0 %v1076
        %v1273 = vpop.f32.mrf.mxu0
        %v1274 = vadd.f32 %v1233, %v1273
        %1275 = vmatmul.f32.gmra.mxu0 %v1078
        %v1276 = vpop.f32.mrf.mxu0
        %v1277 = vadd.f32 %v1236, %v1276
        %1278 = vmatmul.f32.gmra.mxu0 %v1080
        %v1279 = vpop.f32.mrf.mxu0
        %v1280 = vadd.f32 %v1239, %v1279
        %1281 = vmatmul.f32.gmra.mxu0 %v1082
        %v1282 = vpop.f32.mrf.mxu0
        %v1283 = vadd.f32 %v1242, %v1282
        %1284 = vmatmul.f32.gmra.mxu0 %v1084
        %v1285 = vpop.f32.mrf.mxu0
        %v1286 = vadd.f32 %v1245, %v1285
        %1287 = vmatmul.f32.gmra.mxu0 %v550
        %v1288 = vpop.f32.mrf.mxu0
        %v1289 = vadd.f32 %v1248, %v1288
        %1290 = vdwg.mxu0
        %v1291 = vadd.f32 %v1268, %v223
        %v1292 = vadd.f32 %v1271, %v224
        %v1293 = vadd.f32 %v1274, %v225
        %v1294 = vadd.f32 %v1277, %v226
        %v1295 = vadd.f32 %v1280, %v227
        %v1296 = vadd.f32 %v1283, %v228
        %v1297 = vadd.f32 %v1286, %v229
        %v1298 = vadd.f32 %v1289, %v230
        %v1299 = vrot.slane %v1293, 4
        %vm1300 = vcmask 1047556
        %v1301 = vsel %vm1300, %v1299, %v1291
        %v1302 = vrot.slane %v1291, 4
        %v1303 = vsel %vm1300, %v1293, %v1302
        %v1305 = vunpack.c.l.s4 1983009808
        %v1306 = vunpack.c.0.s8 %v1305
        %v1307 = vperm.slane %v1301, %v1306
        %v1309 = vunpack.c.l.s4 1983009808
        %v1310 = vunpack.c.0.s8 %v1309
        %v1311 = vperm.slane %v1303, %v1310
        %v1312 = vrot.slane %v1294, 4
        %v1313 = vsel %vm1300, %v1312, %v1292
        %v1314 = vrot.slane %v1292, 4
        %v1315 = vsel %vm1300, %v1294, %v1314
        %v1317 = vunpack.c.l.s4 1983009808
        %v1318 = vunpack.c.0.s8 %v1317
        %v1319 = vperm.slane %v1313, %v1318
        %v1321 = vunpack.c.l.s4 1983009808
        %v1322 = vunpack.c.0.s8 %v1321
        %v1323 = vperm.slane %v1315, %v1322
        %v1324 = vrot.slane %v1297, 4
        %v1325 = vsel %vm1300, %v1324, %v1295
        %v1326 = vrot.slane %v1295, 4
        %v1327 = vsel %vm1300, %v1297, %v1326
        %v1329 = vunpack.c.l.s4 1983009808
        %v1330 = vunpack.c.0.s8 %v1329
        %v1331 = vperm.slane %v1325, %v1330
        %v1333 = vunpack.c.l.s4 1983009808
        %v1334 = vunpack.c.0.s8 %v1333
        %v1335 = vperm.slane %v1327, %v1334
        %v1336 = vrot.slane %v1298, 4
        %v1337 = vsel %vm1300, %v1336, %v1296
        %v1338 = vrot.slane %v1296, 4
        %v1339 = vsel %vm1300, %v1298, %v1338
        %v1341 = vunpack.c.l.s4 1983009808
        %v1342 = vunpack.c.0.s8 %v1341
        %v1343 = vperm.slane %v1337, %v1342
        %v1345 = vunpack.c.l.s4 1983009808
        %v1346 = vunpack.c.0.s8 %v1345
        %v1347 = vperm.slane %v1339, %v1346
        %v1348 = vrot.slane %v1319, 4
        %v1349 = vsel %vm1300, %v1348, %v1307
        %v1350 = vrot.slane %v1307, 4
        %v1351 = vsel %vm1300, %v1319, %v1350
        %v1353 = vunpack.c.l.s4 1934713408
        %v1354 = vunpack.c.0.s8 %v1353
        %v1355 = vperm.slane %v1349, %v1354
        %v1357 = vunpack.c.l.s4 1934713408
        %v1358 = vunpack.c.0.s8 %v1357
        %v1359 = vperm.slane %v1351, %v1358
        %v1360 = vrot.slane %v1323, 4
        %v1361 = vsel %vm1300, %v1360, %v1311
        %v1362 = vrot.slane %v1311, 4
        %v1363 = vsel %vm1300, %v1323, %v1362
        %v1365 = vunpack.c.l.s4 1934713408
        %v1366 = vunpack.c.0.s8 %v1365
        %v1367 = vperm.slane %v1361, %v1366
        %v1369 = vunpack.c.l.s4 1934713408
        %v1370 = vunpack.c.0.s8 %v1369
        %v1371 = vperm.slane %v1363, %v1370
        %v1372 = vrot.slane %v1343, 4
        %v1373 = vsel %vm1300, %v1372, %v1331
        %v1374 = vrot.slane %v1331, 4
        %v1375 = vsel %vm1300, %v1343, %v1374
        %v1377 = vunpack.c.l.s4 1934713408
        %v1378 = vunpack.c.0.s8 %v1377
        %v1379 = vperm.slane %v1373, %v1378
        %v1381 = vunpack.c.l.s4 1934713408
        %v1382 = vunpack.c.0.s8 %v1381
        %v1383 = vperm.slane %v1375, %v1382
        %v1384 = vrot.slane %v1347, 4
        %v1385 = vsel %vm1300, %v1384, %v1335
        %v1386 = vrot.slane %v1335, 4
        %v1387 = vsel %vm1300, %v1347, %v1386
        %v1389 = vunpack.c.l.s4 1934713408
        %v1390 = vunpack.c.0.s8 %v1389
        %v1391 = vperm.slane %v1385, %v1390
        %v1393 = vunpack.c.l.s4 1934713408
        %v1394 = vunpack.c.0.s8 %v1393
        %v1395 = vperm.slane %v1387, %v1394
        %v1396 = vrot.slane %v1379, 4
        %v1397 = vsel %vm1300, %v1396, %v1355
        %v1398 = vrot.slane %v1355, 4
        %v1399 = vsel %vm1300, %v1379, %v1398
        %v1400 = vrot.slane %v1383, 4
        %v1401 = vsel %vm1300, %v1400, %v1359
        %v1402 = vrot.slane %v1359, 4
        %v1403 = vsel %vm1300, %v1383, %v1402
        %v1404 = vrot.slane %v1391, 4
        %v1405 = vsel %vm1300, %v1404, %v1367
        %v1406 = vrot.slane %v1367, 4
        %v1407 = vsel %vm1300, %v1391, %v1406
        %v1408 = vrot.slane %v1395, 4
        %v1409 = vsel %vm1300, %v1408, %v1371
        %v1410 = vrot.slane %v1371, 4
        %v1411 = vsel %vm1300, %v1395, %v1410
        %1413 = vrot.lane.b32.xlu0 %v1399, 64
        %v1414 = vpop.permute.xlu0 %1413
        %1417 = vrot.lane.b32.xlu0 %v1403, 64
        %v1418 = vpop.permute.xlu0 %1417
        %1421 = vrot.lane.b32.xlu0 %v1407, 64
        %v1422 = vpop.permute.xlu0 %1421
        %1425 = vrot.lane.b32.xlu0 %v1411, 64
        %v1426 = vpop.permute.xlu0 %1425
        %v1428 = vsel %vm378, %v1397, %v1414
        %v1429 = vsel %vm378, %v1401, %v1418
        %v1430 = vsel %vm378, %v1405, %v1422
        %v1431 = vsel %vm378, %v1409, %v1426
        %1432 = vst [vmem:[%s217] sm:$0xff] %v1428
        %1433 = vst [vmem:[%s217 + $0x8] sm:$0xff] %v1429
        %1434 = vst [vmem:[%s217 + $0x10] sm:$0xff] %v1430
        %1435 = vst [vmem:[%s217 + $0x18] sm:$0xff] %v1431
        %s1436 = sand.u32 %s137, 1
        %s1437 = scalar_lea.sflag [#allocation3], %s1436
        %s1438 = sand.u32 %s137, 1
        %s1439 = smul.addr %s1438, 32
        %s1440 = scalar_lea.vmem [#allocation2], %s1439
        // Predicated region
        $region41: #{tpu_custom_call.1} parent=39 // pred_check
          %p1441 = pneg %p147
        $region42: #{tpu_custom_call.1} parent=39 // pred_check_branch
          %1443 = sbr.rel (%p1441) target = $region44
        $region43: #{tpu_custom_call.1} parent=39 // pred_region
          %1445 = vsyncadd %s1437, 0
          %s1446 = smul.addr %s19, 4
          %s1447 = smul.addr %s1446, 8
          %s1448 = scalar_lea.hbm %s5, %s1447
          %s1450 = sshll.u32 %s1440, 4
          %s1451 = int_to_ptr.vmem [resolvable:$true] %s1450
          %s1452 = sshll.u32 %s1448, 4
          %s1453 = int_to_ptr.hbm [resolvable:$true] %s1452
          %1455 = dma.vmem_to_hbm [thread:$0]  %s1451, 512, %s1453, %s1437
        $region44: #{tpu_custom_call.1} parent=39 // pred_fallthru
          _
      $region40: #{tpu_custom_call.1} parent=5 // pred_fallthru
        _
      %p1456 = scmp.le.s32.totalorder 2, %s14
      // Predicated region
      $region45: #{tpu_custom_call.1} parent=5 // pred_check
        %p1457 = pneg %p1456
      $region46: #{tpu_custom_call.1} parent=5 // pred_check_branch
        %1459 = sbr.rel (%p1457) target = $region48
      $region47: #{tpu_custom_call.1} parent=5 // pred_region
        %s1460 = ssub.s32 %s14, 2
        // Predicated region
        $region49: #{tpu_custom_call.1} parent=47 // pred_check
          %p1461 = pneg %p153
        $region50: #{tpu_custom_call.1} parent=47 // pred_check_branch
          %1463 = sbr.rel (%p1461) target = $region52
        $region51: #{tpu_custom_call.1} parent=47 // pred_region
          %s1464 = sand.u32 %s138, 1
          %s1465 = scalar_lea.sflag [#allocation3], %s1464
          %s1466 = sand.u32 %s138, 1
          %s1467 = smul.addr %s1466, 32
          %s1468 = scalar_lea.vmem [#allocation2], %s1467
          %1470 = dma.done %s1465, 512
        $region52: #{tpu_custom_call.1} parent=47 // pred_fallthru
          _
      $region48: #{tpu_custom_call.1} parent=5 // pred_fallthru
        _
    $region6: #{tpu_custom_call.1} parent=1 // loop_footer
      %s18 = sadd.s32 1, %s14
    $region7: #{tpu_custom_call.1} parent=1 // loop_footer_branch
      %13 = sbr.rel target = $region3
    $region8: #{tpu_custom_call.1} parent=1 // loop_exit
      _
    %1471 = vsyncpa [#allocation3], 1
    %s1472 = scalar_lea.sflag [#allocation3], 1
    %1473 = vsyncpa %s1472, 1

</llo_original>
